<compile_context>
chip_gen: v7x
topology: tpu7x:2x2x1
jax: 0.10.0
libtpu: 0.0.40
codegen_flags: <defaults>
</compile_context>

<pallas_src>
import math

import jax
import jax.numpy as jnp
from jax.experimental import pallas as pl
from jax.experimental.pallas import tpu as pltpu

# PyTorch computes log(masks + 1e-45); in float32, 1e-45 rounds to the smallest
# denormal 2^-149, so the masked-position value is -149*ln(2) ~= -103.279.
_LOG_TINY = -149.0 * math.log(2.0)
_LANE = 128
_SUBLANE_BF16 = 16   # bf16 sublane packing for R's char axis
_SUBLANE_F32 = 8


def _round_up(x, m):
    return (x + m - 1) // m * m


def _pad_to(x, shape):
    return jnp.pad(x, [(0, t - s) for s, t in zip(x.shape, shape)])


def char_selector_kernel(hidden_ref, r_ref, mask_n_ref, mask_m_ref,
                         attn_w_ref, attn_b_ref, fc_wT_ref, fc_b_ref,
                         chars_ref, align_ref, masked_ref):
    hidden = hidden_ref[...]                       # [TB, H]     f32
    R = r_ref[...]                                 # [TB, NP, E] bf16
    TB, NP, E = R.shape

    # log(masks + 1e-45): masks are binary, so the log collapses to a select.
    log_mask_n = jnp.where(mask_n_ref[...] > 0.0, 0.0, jnp.float32(_LOG_TINY))  # [TB, NP]
    log_mask_m = jnp.where(mask_m_ref[...] > 0.0, 0.0, jnp.float32(_LOG_TINY))  # [TB, MP]

    # ---- fused attention-score path (all contractions on the MXU) ----------
    # scores[b,n] = <attn(R[b,n,:]), hidden[b,:]>
    #             = R[b,n,:] . (hidden[b,:] @ W) + <hidden[b,:], b_attn>
    v = jnp.dot(hidden.astype(jnp.bfloat16), attn_w_ref[...],
                preferred_element_type=jnp.float32)                     # [TB, E]
    bias = jnp.sum(hidden * attn_b_ref[...], axis=-1, keepdims=True)    # [TB, 1]
    scores = jnp.einsum("bqe,bne->bqn",
                        v.astype(jnp.bfloat16)[:, None, :], R,
                        preferred_element_type=jnp.float32).reshape(TB, NP)
    masked1 = scores + bias + log_mask_n

    # softmax over the (padded) char axis; padded cols contribute exp(~-100)~0.
    m1 = jnp.max(masked1, axis=-1, keepdims=True)
    e1 = jnp.exp(masked1 - m1)
    p1 = e1 / jnp.sum(e1, axis=-1, keepdims=True)

    # chars[b,:] = p1[b,:] @ R[b,:,:]  (batched MXU contraction)
    chars = jnp.einsum("bqn,bne->bqe",
                       p1.astype(jnp.bfloat16)[:, None, :], R,
                       preferred_element_type=jnp.float32).reshape(TB, E)

    # fc(dropout(chars)); dropout is identity in eval mode.
    logits = jnp.dot(chars.astype(jnp.bfloat16), fc_wT_ref[...],
                     preferred_element_type=jnp.float32) + fc_b_ref[...]
    masked2 = logits + log_mask_m
    m2 = jnp.max(masked2, axis=-1, keepdims=True)
    e2 = jnp.exp(masked2 - m2)
    p2 = e2 / jnp.sum(e2, axis=-1, keepdims=True)

    chars_ref[...] = chars           # [TB, E]
    align_ref[...] = p2              # [TB, MP]  full 128-lane stores
    masked_ref[...] = masked2        # [TB, MP]


def character_selector(hidden, R, masks, attn_w, attn_b, fc_w, fc_b,
                       *, batch_tile=128):
    """attn_w: [H, E], attn_b: [H], fc_w: [M, E], fc_b: [M] (PyTorch layout)."""
    B, N, E = R.shape
    H = hidden.shape[1]
    M = fc_w.shape[0]
    assert M == N, "max_num_char must equal num_char (masks are added to fc output)"

    # R's char axis: only bf16 sublane alignment.  fc output / align / masked
    # lane axis: pad to 128 so output stores are unmasked full-lane writes.
    NP = _round_up(N, _SUBLANE_BF16)
    MP = _round_up(M, _LANE)

    # Batch tiling: big tiles amortize per-step overhead and fill the MXU M
    # dimension; keep >=2 grid steps when the batch allows so the "parallel"
    # axis can shard across v7x's two TensorCores.
    TB = min(batch_tile, B)
    if B >= 4 * _SUBLANE_F32:
        TB = min(TB, _round_up(pl.cdiv(B, 2), _SUBLANE_F32))
    BP = _round_up(B, TB)

    f32, bf16 = jnp.float32, jnp.bfloat16
    hidden_p = _pad_to(hidden.astype(f32), (BP, H))
    R_p = _pad_to(R.astype(f32), (BP, NP, E)).astype(bf16)
    mask_n_p = _pad_to(masks.astype(f32), (BP, NP))
    mask_m_p = _pad_to(masks.astype(f32), (BP, MP))
    attn_w_p = attn_w.astype(bf16)                                    # [H, E]
    attn_b_p = attn_b.reshape(1, H).astype(f32)
    fc_wT_p = _pad_to(fc_w.T.astype(f32), (E, MP)).astype(bf16)       # [E, MP]
    fc_b_p = _pad_to(fc_b.reshape(1, M).astype(f32), (1, MP))

    cost = pl.CostEstimate(
        flops=2 * BP * E * (H + 2 * NP + MP),
        transcendentals=BP * (NP + MP),
        bytes_accessed=(hidden_p.size * 4 + R_p.size * 2
                        + mask_n_p.size * 4 + mask_m_p.size * 4
                        + attn_w_p.size * 2 + attn_b_p.size * 4
                        + fc_wT_p.size * 2 + fc_b_p.size * 4
                        + BP * E * 4 + 2 * BP * MP * 4),
    )

    chars_p, align_p, masked_p = pl.pallas_call(
        char_selector_kernel,
        grid=(BP // TB,),
        out_shape=(
            jax.ShapeDtypeStruct((BP, E), f32),    # chars
            jax.ShapeDtypeStruct((BP, MP), f32),   # alignments (softmax)
            jax.ShapeDtypeStruct((BP, MP), f32),   # masked_alignments
        ),
        in_specs=[
            pl.BlockSpec((TB, H), lambda i: (i, 0)),          # hidden
            pl.BlockSpec((TB, NP, E), lambda i: (i, 0, 0)),   # R (dominant stream)
            pl.BlockSpec((TB, NP), lambda i: (i, 0)),         # masks (char layout)
            pl.BlockSpec((TB, MP), lambda i: (i, 0)),         # masks (fc layout)
            pl.BlockSpec((H, E), lambda i: (0, 0)),           # attn_w (resident)
            pl.BlockSpec((1, H), lambda i: (0, 0)),           # attn_b
            pl.BlockSpec((E, MP), lambda i: (0, 0)),          # fc_w^T
            pl.BlockSpec((1, MP), lambda i: (0, 0)),          # fc_b
        ],
        out_specs=(
            pl.BlockSpec((TB, E), lambda i: (i, 0)),
            pl.BlockSpec((TB, MP), lambda i: (i, 0)),
            pl.BlockSpec((TB, MP), lambda i: (i, 0)),
        ),
        compiler_params=pltpu.CompilerParams(
            dimension_semantics=("parallel",)),
        cost_estimate=cost,
    )(hidden_p, R_p, mask_n_p, mask_m_p, attn_w_p, attn_b_p, fc_wT_p, fc_b_p)

    return chars_p[:B, :E], align_p[:B, :N], masked_p[:B, :N]


def _reference(hidden, R, masks, attn_w, attn_b, fc_w, fc_b):
    """Pure-JAX reference using the same bf16 rounding points as the kernel."""
    bf = lambda x: x.astype(jnp.bfloat16).astype(jnp.float32)
    Rb = bf(R)
    log_mask = jnp.where(masks > 0.0, 0.0, jnp.float32(_LOG_TINY))
    v = jnp.dot(bf(hidden), bf(attn_w))                               # [B, E]
    bias = jnp.sum(hidden * attn_b[None, :], axis=-1, keepdims=True)
    scores = jnp.einsum("bne,be->bn", Rb, bf(v)) + bias
    masked1 = scores + log_mask
    p1 = jax.nn.softmax(masked1, axis=-1)
    chars = jnp.einsum("bn,bne->be", bf(p1), Rb)
    logits = jnp.dot(bf(chars), bf(fc_w).T) + fc_b
    masked2 = logits + log_mask
    return chars, jax.nn.softmax(masked2, axis=-1), masked2


if __name__ == "__main__":
    # Small hps: batch=2, num_char = max_num_char = 8, char_emb_size=32,
    # sent_hidden_size=32.
    B, N, E, H = 2, 8, 32, 32
    key = jax.random.PRNGKey(0)
    k1, k2, k3, k4, k5, k6 = jax.random.split(key, 6)

    hidden = jax.random.normal(k1, (B, H), dtype=jnp.float32)
    R = jax.random.normal(k2, (B, N, E), dtype=jnp.float32)
    # masks: first row has 6 valid chars, second row 4 valid chars.
    masks = jnp.stack([
        jnp.concatenate([jnp.ones(6), jnp.zeros(2)]),
        jnp.concatenate([jnp.ones(4), jnp.zeros(4)]),
    ]).astype(jnp.float32)

    bound = 1.0 / math.sqrt(E)
    attn_w = jax.random.uniform(k3, (H, E), minval=-bound, maxval=bound,
                                dtype=jnp.float32)
    attn_b = jax.random.uniform(k4, (H,), minval=-bound, maxval=bound,
                                dtype=jnp.float32)
    fc_w = jax.random.uniform(k5, (N, E), minval=-bound, maxval=bound,
                              dtype=jnp.float32)
    fc_b = jax.random.uniform(k6, (N,), minval=-bound, maxval=bound,
                              dtype=jnp.float32)

    chars, align, masked = character_selector(hidden, R, masks,
                                              attn_w, attn_b, fc_w, fc_b)
    jax.block_until_ready((chars, align, masked))

    # Sanity check against the pure-JAX reference (bf16 MXU operands justify
    # ~1e-2 tolerances).
    rc, ra, rm = _reference(hidden, R, masks, attn_w, attn_b, fc_w, fc_b)
    assert chars.shape == (B, E) and align.shape == (B, N) and masked.shape == (B, N)
    assert jnp.allclose(chars, rc, atol=1e-2, rtol=1e-2)
    assert jnp.allclose(align, ra, atol=1e-2, rtol=1e-2)
    assert jnp.allclose(masked, rm, atol=1e-2, rtol=1e-2)

    print("KERNEL_OK")
</pallas_src>

<mosaic_0001>
module attributes {stable_mosaic.version = 11 : i64} {
  func.func @char_selector_kernel(%arg0: i32, %arg1: memref<2x32xf32, #tpu.memory_space<vmem>>, %arg2: memref<2x16x32xbf16, #tpu.memory_space<vmem>>, %arg3: memref<2x16xf32, #tpu.memory_space<vmem>>, %arg4: memref<2x128xf32, #tpu.memory_space<vmem>>, %arg5: memref<32x32xbf16, #tpu.memory_space<vmem>>, %arg6: memref<1x32xf32, #tpu.memory_space<vmem>>, %arg7: memref<32x128xbf16, #tpu.memory_space<vmem>>, %arg8: memref<1x128xf32, #tpu.memory_space<vmem>>, %arg9: memref<2x32xf32, #tpu.memory_space<vmem>>, %arg10: memref<2x128xf32, #tpu.memory_space<vmem>>, %arg11: memref<2x128xf32, #tpu.memory_space<vmem>>) attributes {dimension_semantics = [#tpu.dimension_semantics<parallel>], iteration_bounds = array<i64: 1>, scalar_prefetch = 0 : i64, scratch_operands = 0 : i64, tpu.core_type = #tpu.core_type<tc>, window_params = [{transform_indices = @transform_0, window_bounds = array<i64: 2, 32>}, {transform_indices = @transform_1, window_bounds = array<i64: 2, 16, 32>}, {transform_indices = @transform_2, window_bounds = array<i64: 2, 16>}, {transform_indices = @transform_3, window_bounds = array<i64: 2, 128>}, {pipeline_mode = #tpu.pipeline_mode<synchronous>, transform_indices = @transform_4, window_bounds = array<i64: 32, 32>}, {pipeline_mode = #tpu.pipeline_mode<synchronous>, transform_indices = @transform_5, window_bounds = array<i64: 1, 32>}, {pipeline_mode = #tpu.pipeline_mode<synchronous>, transform_indices = @transform_6, window_bounds = array<i64: 32, 128>}, {pipeline_mode = #tpu.pipeline_mode<synchronous>, transform_indices = @transform_7, window_bounds = array<i64: 1, 128>}, {transform_indices = @transform_8, window_bounds = array<i64: 2, 32>}, {transform_indices = @transform_9, window_bounds = array<i64: 2, 128>}, {transform_indices = @transform_10, window_bounds = array<i64: 2, 128>}]} {
    %c0 = arith.constant 0 : index
    %c0_0 = arith.constant 0 : index
    %0 = vector.load %arg1[%c0, %c0_0] : memref<2x32xf32, #tpu.memory_space<vmem>>, vector<2x32xf32>
    %c0_1 = arith.constant 0 : index
    %c0_2 = arith.constant 0 : index
    %c0_3 = arith.constant 0 : index
    %1 = vector.load %arg2[%c0_1, %c0_2, %c0_3] : memref<2x16x32xbf16, #tpu.memory_space<vmem>>, vector<2x16x32xbf16>
    %c0_4 = arith.constant 0 : index
    %c0_5 = arith.constant 0 : index
    %2 = vector.load %arg3[%c0_4, %c0_5] : memref<2x16xf32, #tpu.memory_space<vmem>>, vector<2x16xf32>
    %cst = arith.constant 0.000000e+00 : f32
    %3 = vector.broadcast %cst : f32 to vector<2x16xf32>
    %4 = arith.cmpf ogt, %2, %3 : vector<2x16xf32>
    %cst_6 = arith.constant 0.000000e+00 : f32
    %cst_7 = arith.constant -103.278931 : f32
    %5 = vector.broadcast %cst_6 : f32 to vector<2x16xf32>
    %6 = vector.broadcast %cst_7 : f32 to vector<2x16xf32>
    %7 = arith.select %4, %5, %6 : vector<2x16xi1>, vector<2x16xf32>
    %c0_8 = arith.constant 0 : index
    %c0_9 = arith.constant 0 : index
    %8 = vector.load %arg4[%c0_8, %c0_9] : memref<2x128xf32, #tpu.memory_space<vmem>>, vector<2x128xf32>
    %cst_10 = arith.constant 0.000000e+00 : f32
    %9 = vector.broadcast %cst_10 : f32 to vector<2x128xf32>
    %10 = arith.cmpf ogt, %8, %9 : vector<2x128xf32>
    %cst_11 = arith.constant 0.000000e+00 : f32
    %cst_12 = arith.constant -103.278931 : f32
    %11 = vector.broadcast %cst_11 : f32 to vector<2x128xf32>
    %12 = vector.broadcast %cst_12 : f32 to vector<2x128xf32>
    %13 = arith.select %10, %11, %12 : vector<2x128xi1>, vector<2x128xf32>
    %14 = arith.truncf %0 : vector<2x32xf32> to vector<2x32xbf16>
    %c0_13 = arith.constant 0 : index
    %c0_14 = arith.constant 0 : index
    %15 = vector.load %arg5[%c0_13, %c0_14] : memref<32x32xbf16, #tpu.memory_space<vmem>>, vector<32x32xbf16>
    %cst_15 = arith.constant dense<0.000000e+00> : vector<2x32xf32>
    %16 = tpu.matmul %14, %15, %cst_15 {dimension_numbers = #tpu.dot_dimension_numbers<[1], [0], [0], [1], [0, 0, 1, 1], [], []>} : vector<2x32xbf16>, vector<32x32xbf16>, vector<2x32xf32> -> vector<2x32xf32>
    %c0_16 = arith.constant 0 : index
    %c0_17 = arith.constant 0 : index
    %17 = vector.load %arg6[%c0_16, %c0_17] : memref<1x32xf32, #tpu.memory_space<vmem>>, vector<1x32xf32>
    %18 = vector.broadcast %17 : vector<1x32xf32> to vector<2x32xf32>
    %19 = arith.mulf %0, %18 : vector<2x32xf32>
    %cst_18 = arith.constant dense<0.000000e+00> : vector<2xf32>
    %20 = vector.multi_reduction <add>, %19, %cst_18 [1] : vector<2x32xf32> to vector<2xf32>
    %21 = vector.shape_cast %20 : vector<2xf32> to vector<2x1xf32>
    %22 = arith.truncf %16 : vector<2x32xf32> to vector<2x32xbf16>
    %23 = vector.shape_cast %22 : vector<2x32xbf16> to vector<2x1x32xbf16>
    "tpu.trace_start"() <{level = 10 : i32, message = "bqe,bne->bqn"}> : () -> ()
    %cst_19 = arith.constant dense<0.000000e+00> : vector<2x1x16xf32>
    %24 = tpu.matmul %23, %1, %cst_19 {dimension_numbers = #tpu.dot_dimension_numbers<[2], [2], [1], [1], [0, 0, 0, 1, 1, 1], [0], [0]>} : vector<2x1x32xbf16>, vector<2x16x32xbf16>, vector<2x1x16xf32> -> vector<2x1x16xf32>
    "tpu.trace_stop"() : () -> ()
    %25 = vector.shape_cast %24 : vector<2x1x16xf32> to vector<2x16xf32>
    %26 = vector.broadcast %21 : vector<2x1xf32> to vector<2x16xf32>
    %27 = arith.addf %25, %26 : vector<2x16xf32>
    %28 = arith.addf %27, %7 : vector<2x16xf32>
    %cst_20 = arith.constant dense<0xFF800000> : vector<2xf32>
    %29 = vector.multi_reduction <maximumf>, %28, %cst_20 [1] : vector<2x16xf32> to vector<2xf32>
    %30 = vector.shape_cast %29 : vector<2xf32> to vector<2x1xf32>
    %31 = vector.broadcast %30 : vector<2x1xf32> to vector<2x16xf32>
    %32 = arith.subf %28, %31 : vector<2x16xf32>
    %33 = math.exp %32 : vector<2x16xf32>
    %cst_21 = arith.constant dense<0.000000e+00> : vector<2xf32>
    %34 = vector.multi_reduction <add>, %33, %cst_21 [1] : vector<2x16xf32> to vector<2xf32>
    %35 = vector.shape_cast %34 : vector<2xf32> to vector<2x1xf32>
    %36 = vector.broadcast %35 : vector<2x1xf32> to vector<2x16xf32>
    %37 = arith.divf %33, %36 : vector<2x16xf32>
    %38 = arith.truncf %37 : vector<2x16xf32> to vector<2x16xbf16>
    %39 = vector.shape_cast %38 : vector<2x16xbf16> to vector<2x1x16xbf16>
    "tpu.trace_start"() <{level = 10 : i32, message = "bqn,bne->bqe"}> : () -> ()
    %cst_22 = arith.constant dense<0.000000e+00> : vector<2x1x32xf32>
    %40 = tpu.matmul %39, %1, %cst_22 {dimension_numbers = #tpu.dot_dimension_numbers<[2], [1], [1], [2], [0, 0, 0, 1, 1, 2], [0], [0]>} : vector<2x1x16xbf16>, vector<2x16x32xbf16>, vector<2x1x32xf32> -> vector<2x1x32xf32>
    "tpu.trace_stop"() : () -> ()
    %41 = vector.shape_cast %40 : vector<2x1x32xf32> to vector<2x32xf32>
    %42 = arith.truncf %41 : vector<2x32xf32> to vector<2x32xbf16>
    %c0_23 = arith.constant 0 : index
    %c0_24 = arith.constant 0 : index
    %43 = vector.load %arg7[%c0_23, %c0_24] : memref<32x128xbf16, #tpu.memory_space<vmem>>, vector<32x128xbf16>
    %cst_25 = arith.constant dense<0.000000e+00> : vector<2x128xf32>
    %44 = tpu.matmul %42, %43, %cst_25 {dimension_numbers = #tpu.dot_dimension_numbers<[1], [0], [0], [1], [0, 0, 1, 1], [], []>} : vector<2x32xbf16>, vector<32x128xbf16>, vector<2x128xf32> -> vector<2x128xf32>
    %c0_26 = arith.constant 0 : index
    %c0_27 = arith.constant 0 : index
    %45 = vector.load %arg8[%c0_26, %c0_27] : memref<1x128xf32, #tpu.memory_space<vmem>>, vector<1x128xf32>
    %46 = vector.broadcast %45 : vector<1x128xf32> to vector<2x128xf32>
    %47 = arith.addf %44, %46 : vector<2x128xf32>
    %48 = arith.addf %47, %13 : vector<2x128xf32>
    %cst_28 = arith.constant dense<0xFF800000> : vector<2xf32>
    %49 = vector.multi_reduction <maximumf>, %48, %cst_28 [1] : vector<2x128xf32> to vector<2xf32>
    %50 = vector.shape_cast %49 : vector<2xf32> to vector<2x1xf32>
    %51 = vector.broadcast %50 : vector<2x1xf32> to vector<2x128xf32>
    %52 = arith.subf %48, %51 : vector<2x128xf32>
    %53 = math.exp %52 : vector<2x128xf32>
    %cst_29 = arith.constant dense<0.000000e+00> : vector<2xf32>
    %54 = vector.multi_reduction <add>, %53, %cst_29 [1] : vector<2x128xf32> to vector<2xf32>
    %55 = vector.shape_cast %54 : vector<2xf32> to vector<2x1xf32>
    %56 = vector.broadcast %55 : vector<2x1xf32> to vector<2x128xf32>
    %57 = arith.divf %53, %56 : vector<2x128xf32>
    %c0_30 = arith.constant 0 : index
    %c0_31 = arith.constant 0 : index
    %58 = vector.load %arg9[%c0_30, %c0_31] : memref<2x32xf32, #tpu.memory_space<vmem>>, vector<2x32xf32>
    tpu.vector_store %arg9[%c0_30, %c0_31], %41 {strides = array<i32>} : memref<2x32xf32, #tpu.memory_space<vmem>>, vector<2x32xf32>,
    %c0_32 = arith.constant 0 : index
    %c0_33 = arith.constant 0 : index
    %59 = vector.load %arg10[%c0_32, %c0_33] : memref<2x128xf32, #tpu.memory_space<vmem>>, vector<2x128xf32>
    tpu.vector_store %arg10[%c0_32, %c0_33], %57 {strides = array<i32>} : memref<2x128xf32, #tpu.memory_space<vmem>>, vector<2x128xf32>,
    %c0_34 = arith.constant 0 : index
    %c0_35 = arith.constant 0 : index
    %60 = vector.load %arg11[%c0_34, %c0_35] : memref<2x128xf32, #tpu.memory_space<vmem>>, vector<2x128xf32>
    tpu.vector_store %arg11[%c0_34, %c0_35], %48 {strides = array<i32>} : memref<2x128xf32, #tpu.memory_space<vmem>>, vector<2x128xf32>,
    return
  }
  func.func @transform_0(%arg0: i32) -> (i32, i32) {
    %c0_i32 = arith.constant 0 : i32
    %c0_i32_0 = arith.constant 0 : i32
    return %arg0, %c0_i32 : i32, i32
  }
  func.func @transform_1(%arg0: i32) -> (i32, i32, i32) {
    %c0_i32 = arith.constant 0 : i32
    %c0_i32_0 = arith.constant 0 : i32
    %c0_i32_1 = arith.constant 0 : i32
    return %arg0, %c0_i32, %c0_i32_0 : i32, i32, i32
  }
  func.func @transform_2(%arg0: i32) -> (i32, i32) {
    %c0_i32 = arith.constant 0 : i32
    %c0_i32_0 = arith.constant 0 : i32
    return %arg0, %c0_i32 : i32, i32
  }
  func.func @transform_3(%arg0: i32) -> (i32, i32) {
    %c0_i32 = arith.constant 0 : i32
    %c0_i32_0 = arith.constant 0 : i32
    return %arg0, %c0_i32 : i32, i32
  }
  func.func @transform_4(%arg0: i32) -> (i32, i32) {
    %c0_i32 = arith.constant 0 : i32
    %c0_i32_0 = arith.constant 0 : i32
    %c0_i32_1 = arith.constant 0 : i32
    return %c0_i32, %c0_i32_0 : i32, i32
  }
  func.func @transform_5(%arg0: i32) -> (i32, i32) {
    %c0_i32 = arith.constant 0 : i32
    %c0_i32_0 = arith.constant 0 : i32
    %c0_i32_1 = arith.constant 0 : i32
    return %c0_i32, %c0_i32_0 : i32, i32
  }
  func.func @transform_6(%arg0: i32) -> (i32, i32) {
    %c0_i32 = arith.constant 0 : i32
    %c0_i32_0 = arith.constant 0 : i32
    %c0_i32_1 = arith.constant 0 : i32
    return %c0_i32, %c0_i32_0 : i32, i32
  }
  func.func @transform_7(%arg0: i32) -> (i32, i32) {
    %c0_i32 = arith.constant 0 : i32
    %c0_i32_0 = arith.constant 0 : i32
    %c0_i32_1 = arith.constant 0 : i32
    return %c0_i32, %c0_i32_0 : i32, i32
  }
  func.func @transform_8(%arg0: i32) -> (i32, i32) {
    %c0_i32 = arith.constant 0 : i32
    %c0_i32_0 = arith.constant 0 : i32
    return %arg0, %c0_i32 : i32, i32
  }
  func.func @transform_9(%arg0: i32) -> (i32, i32) {
    %c0_i32 = arith.constant 0 : i32
    %c0_i32_0 = arith.constant 0 : i32
    return %arg0, %c0_i32 : i32, i32
  }
  func.func @transform_10(%arg0: i32) -> (i32, i32) {
    %c0_i32 = arith.constant 0 : i32
    %c0_i32_0 = arith.constant 0 : i32
    return %arg0, %c0_i32 : i32, i32
  }
}

</mosaic_0001>

<llo_original>
// kernel: tpu_custom_call.1
$region0: #{tpu_custom_call.1}
  #allocation0 [shape = 'u32[]', space=smem, size = 0x4, offset = 0x4, fixed_abs, tag = 'smem constant byte address 0x4 - core index']
  #allocation1 [shape = 'u32[144,128]{1,0:T(1,128)}', space=vmem, size = 0x12000, scoped, tag = 'internal scratch']
  %s0 = inlined_call_operand.hbm [shape: f32[2,32], index: 0, kind: input, shape index: {}]
  %s1 = inlined_call_operand.hbm [shape: bf16[2,16,32], index: 1, kind: input, shape index: {}]
  %s2 = inlined_call_operand.vmem [shape: f32[2,16], index: 2, kind: input, shape index: {}]
  %s3 = inlined_call_operand.vmem [shape: f32[2,128], index: 3, kind: input, shape index: {}]
  %s4 = inlined_call_operand.hbm [shape: bf16[32,32], index: 4, kind: input, shape index: {}]
  %s5 = inlined_call_operand.vmem [shape: f32[1,32], index: 5, kind: input, shape index: {}]
  %s6 = inlined_call_operand.vmem [shape: bf16[32,128], index: 6, kind: input, shape index: {}]
  %s7 = inlined_call_operand.vmem [shape: f32[1,128], index: 7, kind: input, shape index: {}]
  %s8 = inlined_call_operand.hbm [shape: f32[2,32], index: 8, kind: output, shape index: {0}]
  %s9 = inlined_call_operand.hbm [shape: f32[2,128], index: 9, kind: output, shape index: {1}]
  %s10 = inlined_call_operand.hbm [shape: f32[2,128], index: 10, kind: output, shape index: {2}]
  %11 = xla_tuple %s8, %s9, %s10
  %s12 = sld [smem:[#allocation0]]
  $region70: #{tpu_custom_call.1} parent=0
    _
  %s14 = ssub.s32 1, %s12
  %s15 = scalar_select 0, %s14, %s12
  $region1: #{tpu_custom_call.1} parent=0
    #allocation2 [shape = 'u8[1024]{0}', space=vmem, size = 0x400, scoped, tag = 'input window, operand 0, single buffered']
    #allocation3 [shape = 's32[1]{0}', space=sflag, size = 0x4, scoped, tag = 'scoped memory for tpu_custom_call.1']
    #allocation4 [shape = 's32[1]{0}', space=sflag, size = 0x4, scoped, tag = 'scoped memory for tpu_custom_call.1']
    #allocation5 [shape = 'u8[8192]{0}', space=vmem, size = 0x2000, scoped, tag = 'input window, operand 1, single buffered']
    #allocation6 [shape = 's32[1]{0}', space=sflag, size = 0x4, scoped, tag = 'scoped memory for tpu_custom_call.1']
    #allocation7 [shape = 'u8[8192]{0}', space=vmem, size = 0x2000, scoped, tag = 'input window, operand 4, single buffered']
    #allocation8 [shape = 'u8[1024]{0}', space=vmem, size = 0x400, scoped, tag = 'output window, operand 0, single buffered']
    #allocation9 [shape = 'u8[1024]{0}', space=vmem, size = 0x400, scoped, tag = 'output window, operand 1, single buffered']
    #allocation10 [shape = 's32[1]{0}', space=sflag, size = 0x4, scoped, tag = 'scoped memory for tpu_custom_call.1']
    #allocation11 [shape = 'u8[1024]{0}', space=vmem, size = 0x400, scoped, tag = 'output window, operand 2, single buffered']
    %16 = vsyncpa [#allocation3], 0
    %17 = vsyncpa [#allocation6], 0
    %18 = vsyncpa [#allocation4], 0
    %19 = vsyncpa [#allocation10], 0
    // Predicated region
    $region2: #{tpu_custom_call.1} parent=1 // pred_check
      _
    $region3: #{tpu_custom_call.1} parent=1 // pred_check_branch
      %21 = sbr.rel (0) target = $region5
    $region4: #{tpu_custom_call.1} parent=1 // pred_region
      %s23 = ssub.s32 32, 32
      %24 = vsyncadd [#allocation3], %s23
      %s26 = sshll.u32 [#allocation2], 4
      %s27 = int_to_ptr.vmem [resolvable:$true] %s26
      %29 = dma.hbm_to_vmem [thread:$0]  %s0, 32, %s27, [#allocation3]
    $region5: #{tpu_custom_call.1} parent=1 // pred_fallthru
      _
    // Predicated region
    $region6: #{tpu_custom_call.1} parent=1 // pred_check
      _
    $region7: #{tpu_custom_call.1} parent=1 // pred_check_branch
      %31 = sbr.rel (0) target = $region9
    $region8: #{tpu_custom_call.1} parent=1 // pred_region
      %s33 = ssub.s32 256, 256
      %34 = vsyncadd [#allocation6], %s33
      %s35 = sshll.u32 [#allocation5], 4
      %s36 = int_to_ptr.vmem [resolvable:$true] %s35
      %41 = dma.hbm_to_vmem [thread:$0]  %s1, 256, %s36, [#allocation6], 64, 64, 4
    $region9: #{tpu_custom_call.1} parent=1 // pred_fallthru
      _
    // Predicated region
    $region10: #{tpu_custom_call.1} parent=1 // pred_check
      _
    $region11: #{tpu_custom_call.1} parent=1 // pred_check_branch
      %43 = sbr.rel (0) target = $region13
    $region12: #{tpu_custom_call.1} parent=1 // pred_region
      _
    $region13: #{tpu_custom_call.1} parent=1 // pred_fallthru
      _
    // Predicated region
    $region14: #{tpu_custom_call.1} parent=1 // pred_check
      _
    $region15: #{tpu_custom_call.1} parent=1 // pred_check_branch
      %45 = sbr.rel (0) target = $region17
    $region16: #{tpu_custom_call.1} parent=1 // pred_region
      _
    $region17: #{tpu_custom_call.1} parent=1 // pred_fallthru
      _
    // Predicated region
    $region18: #{tpu_custom_call.1} parent=1 // pred_check
      _
    $region19: #{tpu_custom_call.1} parent=1 // pred_check_branch
      %47 = sbr.rel (0) target = $region21
    $region20: #{tpu_custom_call.1} parent=1 // pred_region
      %s49 = ssub.s32 256, 256
      %50 = vsyncadd [#allocation6], %s49
      %s51 = sshll.u32 [#allocation7], 4
      %s52 = int_to_ptr.vmem [resolvable:$true] %s51
      %57 = dma.hbm_to_vmem [thread:$0]  %s4, 256, %s52, [#allocation6], 64, 64, 4
    $region21: #{tpu_custom_call.1} parent=1 // pred_fallthru
      _
    // Predicated region
    $region22: #{tpu_custom_call.1} parent=1 // pred_check
      _
    $region23: #{tpu_custom_call.1} parent=1 // pred_check_branch
      %59 = sbr.rel (0) target = $region25
    $region24: #{tpu_custom_call.1} parent=1 // pred_region
      _
    $region25: #{tpu_custom_call.1} parent=1 // pred_fallthru
      _
    // Predicated region
    $region26: #{tpu_custom_call.1} parent=1 // pred_check
      _
    $region27: #{tpu_custom_call.1} parent=1 // pred_check_branch
      %61 = sbr.rel (0) target = $region29
    $region28: #{tpu_custom_call.1} parent=1 // pred_region
      _
    $region29: #{tpu_custom_call.1} parent=1 // pred_fallthru
      _
    // Predicated region
    $region30: #{tpu_custom_call.1} parent=1 // pred_check
      _
    $region31: #{tpu_custom_call.1} parent=1 // pred_check_branch
      %63 = sbr.rel (0) target = $region33
    $region32: #{tpu_custom_call.1} parent=1 // pred_region
      _
    $region33: #{tpu_custom_call.1} parent=1 // pred_fallthru
      _
    // Predicated region
    $region34: #{tpu_custom_call.1} parent=1 // pred_check
      _
    $region35: #{tpu_custom_call.1} parent=1 // pred_check_branch
      %65 = sbr.rel (0) target = $region37
    $region36: #{tpu_custom_call.1} parent=1 // pred_region
      %66 = dma.done [#allocation3], 32
    $region37: #{tpu_custom_call.1} parent=1 // pred_fallthru
      _
    // Predicated region
    $region38: #{tpu_custom_call.1} parent=1 // pred_check
      _
    $region39: #{tpu_custom_call.1} parent=1 // pred_check_branch
      %68 = sbr.rel (0) target = $region41
    $region40: #{tpu_custom_call.1} parent=1 // pred_region
      %69 = dma.done [#allocation6], 256
    $region41: #{tpu_custom_call.1} parent=1 // pred_fallthru
      _
    // Predicated region
    $region42: #{tpu_custom_call.1} parent=1 // pred_check
      _
    $region43: #{tpu_custom_call.1} parent=1 // pred_check_branch
      %71 = sbr.rel (0) target = $region45
    $region44: #{tpu_custom_call.1} parent=1 // pred_region
      %72 = dma.done [#allocation6], 256
    $region45: #{tpu_custom_call.1} parent=1 // pred_fallthru
      _
    %v74 = vld [vmem:[#allocation2] sm:$0x3]
    %v75 = vld [vmem:[#allocation5] sm:$0xf]
    %v76 = vld [vmem:[#allocation5 + $0x4] sm:$0xf]
    %v77 = vld [vmem:[#allocation5 + $0x8] sm:$0xf]
    %v78 = vld [vmem:[#allocation5 + $0xc] sm:$0xf]
    %v79 = vld [vmem:[%s2] sm:$0x3]
    %vm80 = vcmp.gt.f32.partialorder %v79, 0.0
    %v81 = vsel %vm80, 0.0, -103.27893
    %v82 = vld [vmem:[%s3] sm:$0x3]
    %vm83 = vcmp.gt.f32.partialorder %v82, 0.0
    %v84 = vsel %vm83, 0.0, -103.27893
    %v85 = vpack.c.bf16 %v74, %v74
    %v86 = vld [vmem:[#allocation7] sm:$0xf]
    %v87 = vld [vmem:[#allocation7 + $0x4] sm:$0xf]
    %v88 = vld [vmem:[#allocation7 + $0x8] sm:$0xf]
    %v89 = vld [vmem:[#allocation7 + $0xc] sm:$0xf]
    %v94 = vunpack.c.l.b16 %v86
    %v95 = vunpack.c.l.b16 %v87
    %v96 = vunpack.c.l.b16 %v88
    %v97 = vunpack.c.l.b16 %v89
    %v98 = vpack.c.b16 %v95, %v94
    %v99 = vpack.c.b16 %v97, %v96
    %vm102 = vcmask 261120
    %v104 = vsel %vm102, %v85, 0
    %106 = vmatprep.subr.bf16.mxu0 0
    %107 = vmatpush1.bf16.msra.mxu0 %v98
    %108 = vmatprep.subr.bf16.mxu0 0
    %109 = vmatpush1.bf16.msra.mxu0 %v99
    %110 = vmatprep.subr.bf16.mxu0 0
    %111 = vmatpush1.bf16.msra.mxu0 0
    %112 = vmatprep.subr.bf16.mxu0 0
    %113 = vmatpush1.bf16.msra.mxu0 0
    %114 = vmatprep.subr.bf16.mxu0 0
    %115 = vmatpush1.bf16.msra.mxu0 0
    %116 = vmatprep.subr.bf16.mxu0 0
    %117 = vmatpush1.bf16.msra.mxu0 0
    %118 = vmatprep.subr.bf16.mxu0 0
    %119 = vmatpush1.bf16.msra.mxu0 0
    %120 = vmatprep.subr.bf16.mxu0 0
    %121 = vmatpush1.bf16.msra.mxu0 0
    %122 = vmatprep.subr.bf16.mxu0 0
    %123 = vmatpush1.bf16.msra.mxu0 0
    %124 = vmatprep.subr.bf16.mxu0 0
    %125 = vmatpush1.bf16.msra.mxu0 0
    %126 = vmatprep.subr.bf16.mxu0 0
    %127 = vmatpush1.bf16.msra.mxu0 0
    %128 = vmatprep.subr.bf16.mxu0 0
    %129 = vmatpush1.bf16.msra.mxu0 0
    %130 = vmatprep.subr.bf16.mxu0 0
    %131 = vmatpush1.bf16.msra.mxu0 0
    %132 = vmatprep.subr.bf16.mxu0 0
    %133 = vmatpush1.bf16.msra.mxu0 0
    %134 = vmatprep.subr.bf16.mxu0 0
    %135 = vmatpush1.bf16.msra.mxu0 0
    %136 = vmatprep.subr.bf16.mxu0 0
    %137 = vmatpush1.bf16.msra.mxu0 0
    %138 = vmatprep.mubr.bf16.mxu0 0
    %139 = vmatmul.mubr.bf16.gmra.mrb[0].mxu0 %v104
    %v140 = vpop.f32.mrb[0].mxu0
    %v141 = vadd.f32 0.0, %v140
    %v142 = vpop.f32.mrb[0].mxu0
    %v143 = vpop.f32.mrb[0].mxu0
    %v144 = vpop.f32.mrb[0].mxu0
    %145 = vdwg.mxu0
    %v146 = vld [vmem:[%s5] sm:$0x1]
    %v148 = vlaneseq
    %v149 = vshrl.u32 %v148, 7
    %v150 = vsub.s32 0, %v149
    %v151 = vrot.slane %v146, %v150
    %v153 = vmul.f32 %v74, %v151
    %vm154 = vcmask 254976
    %v155 = vsel %vm154, %v153, 0.0
    %156 = vadd.xlane.f32.xlu0 %v155
    %v157 = vpop.xlane.xlu0 %156
    %v158 = vpack.c.bf16 %v141, %v141
    %v161 = vunpack.c.l.s4 1966171168
    %v162 = vunpack.c.0.s8 %v161
    %v163 = vlaneseq
    %v164 = vshrl.u32 %v163, 7
    %v165 = vsub.s32 %v162, %v164
    %v166 = vrot.slane %v158, %v165
    %v168 = vunpack.c.l.s4 1966171168
    %v169 = vunpack.c.0.s8 %v168
    %v170 = vlaneseq
    %v171 = vshrl.u32 %v170, 7
    %v172 = vsub.s32 %v169, %v171
    %v173 = vrot.slane %v166, %v172
    %v174 = vunpack.i.l.s16 %v173
    %v175 = vunpack.i.h.s16 %v173
    %v176 = vpack.i.b16 %v174, %v174
    %v177 = vlaneseq
    %v178 = vshrl.u32 %v177, 7
    %v179 = vsub.s32 0, %v178
    %v180 = vrot.slane %v176, %v179
    %v183 = vunpack.c.l.b16 %v75
    %v184 = vunpack.c.l.b16 %v76
    %v185 = vpack.c.b16 %v184, %v183
    %v187 = vsel %vm102, %v180, 0
    %v190 = vsel %vm102, %v185, 0
    %192 = vmatprep.subr.bf16.mxu0 0
    %193 = vmatpush1.bf16.xpose.msra.mxu0 %v190
    %194 = vmatprep.subr.bf16.mxu0 0
    %195 = vmatpush1.bf16.xpose.msra.mxu0 0
    %196 = vmatprep.subr.bf16.mxu0 0
    %197 = vmatpush1.bf16.xpose.msra.mxu0 0
    %198 = vmatprep.subr.bf16.mxu0 0
    %199 = vmatpush1.bf16.xpose.msra.mxu0 0
    %200 = vmatprep.subr.bf16.mxu0 0
    %201 = vmatpush1.bf16.xpose.msra.mxu0 0
    %202 = vmatprep.subr.bf16.mxu0 0
    %203 = vmatpush1.bf16.xpose.msra.mxu0 0
    %204 = vmatprep.subr.bf16.mxu0 0
    %205 = vmatpush1.bf16.xpose.msra.mxu0 0
    %206 = vmatprep.subr.bf16.mxu0 0
    %207 = vmatpush1.bf16.xpose.msra.mxu0 0
    %208 = vmatprep.subr.bf16.mxu0 0
    %209 = vmatpush1.bf16.xpose.msra.mxu0 0
    %210 = vmatprep.subr.bf16.mxu0 0
    %211 = vmatpush1.bf16.xpose.msra.mxu0 0
    %212 = vmatprep.subr.bf16.mxu0 0
    %213 = vmatpush1.bf16.xpose.msra.mxu0 0
    %214 = vmatprep.subr.bf16.mxu0 0
    %215 = vmatpush1.bf16.xpose.msra.mxu0 0
    %216 = vmatprep.subr.bf16.mxu0 0
    %217 = vmatpush1.bf16.xpose.msra.mxu0 0
    %218 = vmatprep.subr.bf16.mxu0 0
    %219 = vmatpush1.bf16.xpose.msra.mxu0 0
    %220 = vmatprep.subr.bf16.mxu0 0
    %221 = vmatpush1.bf16.xpose.msra.mxu0 0
    %222 = vmatprep.subr.bf16.mxu0 0
    %223 = vmatpush1.bf16.xpose.msra.mxu0 0
    %224 = vmatprep.mubr.bf16.mxu0 0
    %225 = vmatmul.mubr.bf16.gmra.mrb[0].mxu0 %v187
    %v226 = vpop.f32.mrb[0].mxu0
    %v227 = vadd.f32 0.0, %v226
    %v228 = vpop.f32.mrb[0].mxu0
    %v229 = vpop.f32.mrb[0].mxu0
    %v230 = vpop.f32.mrb[0].mxu0
    %231 = vdwg.mxu0
    %v232 = vpack.i.b16 %v175, %v175
    %v233 = vlaneseq
    %v234 = vshrl.u32 %v233, 7
    %v235 = vsub.s32 0, %v234
    %v236 = vrot.slane %v232, %v235
    %v239 = vunpack.c.l.b16 %v77
    %v240 = vunpack.c.l.b16 %v78
    %v241 = vpack.c.b16 %v240, %v239
    %v243 = vsel %vm102, %v236, 0
    %v246 = vsel %vm102, %v241, 0
    %248 = vmatprep.subr.bf16.mxu0 0
    %249 = vmatpush1.bf16.xpose.msra.mxu0 %v246
    %250 = vmatprep.subr.bf16.mxu0 0
    %251 = vmatpush1.bf16.xpose.msra.mxu0 0
    %252 = vmatprep.subr.bf16.mxu0 0
    %253 = vmatpush1.bf16.xpose.msra.mxu0 0
    %254 = vmatprep.subr.bf16.mxu0 0
    %255 = vmatpush1.bf16.xpose.msra.mxu0 0
    %256 = vmatprep.subr.bf16.mxu0 0
    %257 = vmatpush1.bf16.xpose.msra.mxu0 0
    %258 = vmatprep.subr.bf16.mxu0 0
    %259 = vmatpush1.bf16.xpose.msra.mxu0 0
    %260 = vmatprep.subr.bf16.mxu0 0
    %261 = vmatpush1.bf16.xpose.msra.mxu0 0
    %262 = vmatprep.subr.bf16.mxu0 0
    %263 = vmatpush1.bf16.xpose.msra.mxu0 0
    %264 = vmatprep.subr.bf16.mxu0 0
    %265 = vmatpush1.bf16.xpose.msra.mxu0 0
    %266 = vmatprep.subr.bf16.mxu0 0
    %267 = vmatpush1.bf16.xpose.msra.mxu0 0
    %268 = vmatprep.subr.bf16.mxu0 0
    %269 = vmatpush1.bf16.xpose.msra.mxu0 0
    %270 = vmatprep.subr.bf16.mxu0 0
    %271 = vmatpush1.bf16.xpose.msra.mxu0 0
    %272 = vmatprep.subr.bf16.mxu0 0
    %273 = vmatpush1.bf16.xpose.msra.mxu0 0
    %274 = vmatprep.subr.bf16.mxu0 0
    %275 = vmatpush1.bf16.xpose.msra.mxu0 0
    %276 = vmatprep.subr.bf16.mxu0 0
    %277 = vmatpush1.bf16.xpose.msra.mxu0 0
    %278 = vmatprep.subr.bf16.mxu0 0
    %279 = vmatpush1.bf16.xpose.msra.mxu0 0
    %280 = vmatprep.mubr.bf16.mxu0 0
    %281 = vmatmul.mubr.bf16.gmra.mrb[0].mxu0 %v243
    %v282 = vpop.f32.mrb[0].mxu0
    %v283 = vadd.f32 0.0, %v282
    %v284 = vpop.f32.mrb[0].mxu0
    %v285 = vpop.f32.mrb[0].mxu0
    %v286 = vpop.f32.mrb[0].mxu0
    %287 = vdwg.mxu0
    %v289 = vrot.slane %v157, 1
    %v292 = vadd.f32 %v227, %v157
    %v293 = vadd.f32 %v283, %v289
    %v295 = vrot.slane %v81, 1
    %v298 = vadd.f32 %v292, %v81
    %v299 = vadd.f32 %v293, %v295
    %v302 = vrot.slane %v299, 7
    %vm303 = vcmask 1041409
    %v304 = vsel %vm303, %v302, %v298
    %vm306 = vcmask 123904
    %v307 = vsel %vm306, %v304, -inf
    %308 = vmax.xlane.f32.xlu0 %v307
    %v309 = vpop.xlane.xlu0 %308
    %v311 = vrot.slane %v309, 1
    %v314 = vsub.f32 %v298, %v309
    %v315 = vsub.f32 %v299, %v311
    %v316 = vmul.f32 %v314, 1.442695
    %v317 = vpow.pop %v316
    %v318 = vmul.f32 %v315, 1.442695
    %v319 = vpow.pop %v318
    %v322 = vrot.slane %v319, 7
    %v323 = vsel %vm303, %v322, %v317
    %v325 = vsel %vm306, %v323, 0.0
    %326 = vadd.xlane.f32.xlu0 %v325
    %v327 = vpop.xlane.xlu0 %326
    %v329 = vrot.slane %v327, 1
    %v332 = vrcp.pop %v327
    %v333 = vmul.f32 %v317, %v332
    %v334 = vrcp.pop %v329
    %v335 = vmul.f32 %v319, %v334
    %v336 = vpack.c.bf16 %v333, %v333
    %v337 = vpack.c.bf16 %v335, %v335
    %vm339 = vcmask 130048
    %v341 = vsel %vm339, %v336, 0
    %343 = vmatprep.subr.bf16.mxu0 0
    %344 = vmatpush1.bf16.msra.mxu0 %v185
    %345 = vmatprep.subr.bf16.mxu0 0
    %346 = vmatpush1.bf16.msra.mxu0 0
    %347 = vmatprep.subr.bf16.mxu0 0
    %348 = vmatpush1.bf16.msra.mxu0 0
    %349 = vmatprep.subr.bf16.mxu0 0
    %350 = vmatpush1.bf16.msra.mxu0 0
    %351 = vmatprep.subr.bf16.mxu0 0
    %352 = vmatpush1.bf16.msra.mxu0 0
    %353 = vmatprep.subr.bf16.mxu0 0
    %354 = vmatpush1.bf16.msra.mxu0 0
    %355 = vmatprep.subr.bf16.mxu0 0
    %356 = vmatpush1.bf16.msra.mxu0 0
    %357 = vmatprep.subr.bf16.mxu0 0
    %358 = vmatpush1.bf16.msra.mxu0 0
    %359 = vmatprep.subr.bf16.mxu0 0
    %360 = vmatpush1.bf16.msra.mxu0 0
    %361 = vmatprep.subr.bf16.mxu0 0
    %362 = vmatpush1.bf16.msra.mxu0 0
    %363 = vmatprep.subr.bf16.mxu0 0
    %364 = vmatpush1.bf16.msra.mxu0 0
    %365 = vmatprep.subr.bf16.mxu0 0
    %366 = vmatpush1.bf16.msra.mxu0 0
    %367 = vmatprep.subr.bf16.mxu0 0
    %368 = vmatpush1.bf16.msra.mxu0 0
    %369 = vmatprep.subr.bf16.mxu0 0
    %370 = vmatpush1.bf16.msra.mxu0 0
    %371 = vmatprep.subr.bf16.mxu0 0
    %372 = vmatpush1.bf16.msra.mxu0 0
    %373 = vmatprep.subr.bf16.mxu0 0
    %374 = vmatpush1.bf16.msra.mxu0 0
    %375 = vmatprep.mubr.bf16.mxu0 0
    %376 = vmatmul.mubr.bf16.gmra.mrb[0].mxu0 %v341
    %v377 = vpop.f32.mrb[0].mxu0
    %v378 = vadd.f32 0.0, %v377
    %v379 = vpop.f32.mrb[0].mxu0
    %v380 = vpop.f32.mrb[0].mxu0
    %v381 = vpop.f32.mrb[0].mxu0
    %382 = vdwg.mxu0
    %v385 = vsel %vm339, %v337, 0
    %387 = vmatprep.subr.bf16.mxu0 0
    %388 = vmatpush1.bf16.msra.mxu0 %v241
    %389 = vmatprep.subr.bf16.mxu0 0
    %390 = vmatpush1.bf16.msra.mxu0 0
    %391 = vmatprep.subr.bf16.mxu0 0
    %392 = vmatpush1.bf16.msra.mxu0 0
    %393 = vmatprep.subr.bf16.mxu0 0
    %394 = vmatpush1.bf16.msra.mxu0 0
    %395 = vmatprep.subr.bf16.mxu0 0
    %396 = vmatpush1.bf16.msra.mxu0 0
    %397 = vmatprep.subr.bf16.mxu0 0
    %398 = vmatpush1.bf16.msra.mxu0 0
    %399 = vmatprep.subr.bf16.mxu0 0
    %400 = vmatpush1.bf16.msra.mxu0 0
    %401 = vmatprep.subr.bf16.mxu0 0
    %402 = vmatpush1.bf16.msra.mxu0 0
    %403 = vmatprep.subr.bf16.mxu0 0
    %404 = vmatpush1.bf16.msra.mxu0 0
    %405 = vmatprep.subr.bf16.mxu0 0
    %406 = vmatpush1.bf16.msra.mxu0 0
    %407 = vmatprep.subr.bf16.mxu0 0
    %408 = vmatpush1.bf16.msra.mxu0 0
    %409 = vmatprep.subr.bf16.mxu0 0
    %410 = vmatpush1.bf16.msra.mxu0 0
    %411 = vmatprep.subr.bf16.mxu0 0
    %412 = vmatpush1.bf16.msra.mxu0 0
    %413 = vmatprep.subr.bf16.mxu0 0
    %414 = vmatpush1.bf16.msra.mxu0 0
    %415 = vmatprep.subr.bf16.mxu0 0
    %416 = vmatpush1.bf16.msra.mxu0 0
    %417 = vmatprep.subr.bf16.mxu0 0
    %418 = vmatpush1.bf16.msra.mxu0 0
    %419 = vmatprep.mubr.bf16.mxu0 0
    %420 = vmatmul.mubr.bf16.gmra.mrb[0].mxu0 %v385
    %v421 = vpop.f32.mrb[0].mxu0
    %v422 = vadd.f32 0.0, %v421
    %v423 = vpop.f32.mrb[0].mxu0
    %v424 = vpop.f32.mrb[0].mxu0
    %v425 = vpop.f32.mrb[0].mxu0
    %426 = vdwg.mxu0
    %v427 = vpack.c.bf16 %v378, %v378
    %v428 = vpack.c.bf16 %v422, %v422
    %v429 = vld [vmem:[%s6] sm:$0xf]
    %v430 = vld [vmem:[%s6 + $0x4] sm:$0xf]
    %v431 = vld [vmem:[%s6 + $0x8] sm:$0xf]
    %v432 = vld [vmem:[%s6 + $0xc] sm:$0xf]
    %v433 = vld [vmem:[%s7] sm:$0x1]
    %v435 = vlaneseq
    %v436 = vshrl.u32 %v435, 7
    %v437 = vsub.s32 0, %v436
    %v438 = vrot.slane %v433, %v437
    %v442 = vunpack.c.l.b16 %v427
    %v443 = vunpack.c.l.b16 %v428
    %v444 = vrot.slane %v443, 7
    %v445 = vsel %vm303, %v444, %v442
    %v446 = vpack.c.b16 %v445, %v445
    %v451 = vunpack.c.l.b16 %v429
    %v452 = vunpack.c.l.b16 %v430
    %v453 = vunpack.c.l.b16 %v431
    %v454 = vunpack.c.l.b16 %v432
    %v455 = vpack.c.b16 %v452, %v451
    %v456 = vpack.c.b16 %v454, %v453
    %v460 = vsel %vm102, %v446, 0
    %462 = vmatprep.subr.bf16.mxu0 0
    %463 = vmatpush1.bf16.msra.mxu0 %v455
    %464 = vmatprep.subr.bf16.mxu0 0
    %465 = vmatpush1.bf16.msra.mxu0 %v456
    %466 = vmatprep.subr.bf16.mxu0 0
    %467 = vmatpush1.bf16.msra.mxu0 0
    %468 = vmatprep.subr.bf16.mxu0 0
    %469 = vmatpush1.bf16.msra.mxu0 0
    %470 = vmatprep.subr.bf16.mxu0 0
    %471 = vmatpush1.bf16.msra.mxu0 0
    %472 = vmatprep.subr.bf16.mxu0 0
    %473 = vmatpush1.bf16.msra.mxu0 0
    %474 = vmatprep.subr.bf16.mxu0 0
    %475 = vmatpush1.bf16.msra.mxu0 0
    %476 = vmatprep.subr.bf16.mxu0 0
    %477 = vmatpush1.bf16.msra.mxu0 0
    %478 = vmatprep.subr.bf16.mxu0 0
    %479 = vmatpush1.bf16.msra.mxu0 0
    %480 = vmatprep.subr.bf16.mxu0 0
    %481 = vmatpush1.bf16.msra.mxu0 0
    %482 = vmatprep.subr.bf16.mxu0 0
    %483 = vmatpush1.bf16.msra.mxu0 0
    %484 = vmatprep.subr.bf16.mxu0 0
    %485 = vmatpush1.bf16.msra.mxu0 0
    %486 = vmatprep.subr.bf16.mxu0 0
    %487 = vmatpush1.bf16.msra.mxu0 0
    %488 = vmatprep.subr.bf16.mxu0 0
    %489 = vmatpush1.bf16.msra.mxu0 0
    %490 = vmatprep.subr.bf16.mxu0 0
    %491 = vmatpush1.bf16.msra.mxu0 0
    %492 = vmatprep.subr.bf16.mxu0 0
    %493 = vmatpush1.bf16.msra.mxu0 0
    %494 = vmatprep.mubr.bf16.mxu0 0
    %495 = vmatmul.mubr.bf16.gmra.mrb[0].mxu0 %v460
    %v496 = vpop.f32.mrb[0].mxu0
    %v497 = vadd.f32 %v438, %v496
    %v498 = vpop.f32.mrb[0].mxu0
    %v499 = vpop.f32.mrb[0].mxu0
    %v500 = vpop.f32.mrb[0].mxu0
    %501 = vdwg.mxu0
    %v502 = vadd.f32 %v497, %v84
    %vm503 = vcmask 1041408
    %v504 = vsel %vm503, %v502, -inf
    %505 = vmax.xlane.f32.xlu0 %v504
    %v506 = vpop.xlane.xlu0 %505
    %v507 = vsub.f32 %v502, %v506
    %v508 = vmul.f32 %v507, 1.442695
    %v509 = vpow.pop %v508
    %v510 = vsel %vm503, %v509, 0.0
    %511 = vadd.xlane.f32.xlu0 %v510
    %v512 = vpop.xlane.xlu0 %511
    %v513 = vrcp.pop %v512
    %v514 = vmul.f32 %v509, %v513
    %v517 = vrot.slane %v422, 7
    %v518 = vsel %vm303, %v517, %v378
    %520 = vst.msk [vmem:[#allocation8] sm:$0x3] %vm154, %v518
    %521 = vst [vmem:[#allocation9] sm:$0x3] %v514
    %522 = vst [vmem:[#allocation11] sm:$0x3] %v502
    // Predicated region
    $region46: #{tpu_custom_call.1} parent=1 // pred_check
      _
    $region47: #{tpu_custom_call.1} parent=1 // pred_check_branch
      %524 = sbr.rel (0) target = $region49
    $region48: #{tpu_custom_call.1} parent=1 // pred_region
      %s526 = ssub.s32 32, 32
      %527 = vsyncadd [#allocation4], %s526
      %s529 = sshll.u32 [#allocation8], 4
      %s530 = int_to_ptr.vmem [resolvable:$true] %s529
      %532 = dma.vmem_to_hbm [thread:$0]  %s530, 32, %s8, [#allocation4]
    $region49: #{tpu_custom_call.1} parent=1 // pred_fallthru
      _
    // Predicated region
    $region50: #{tpu_custom_call.1} parent=1 // pred_check
      _
    $region51: #{tpu_custom_call.1} parent=1 // pred_check_branch
      %534 = sbr.rel (0) target = $region53
    $region52: #{tpu_custom_call.1} parent=1 // pred_region
      %s536 = ssub.s32 32, 32
      %537 = vsyncadd [#allocation10], %s536
      %s539 = sshll.u32 [#allocation9], 4
      %s540 = int_to_ptr.vmem [resolvable:$true] %s539
      %542 = dma.vmem_to_hbm [thread:$0]  %s540, 32, %s9, [#allocation10]
    $region53: #{tpu_custom_call.1} parent=1 // pred_fallthru
      _
    // Predicated region
    $region54: #{tpu_custom_call.1} parent=1 // pred_check
      _
    $region55: #{tpu_custom_call.1} parent=1 // pred_check_branch
      %544 = sbr.rel (0) target = $region57
    $region56: #{tpu_custom_call.1} parent=1 // pred_region
      %s546 = ssub.s32 32, 32
      %547 = vsyncadd [#allocation10], %s546
      %s549 = sshll.u32 [#allocation11], 4
      %s550 = int_to_ptr.vmem [resolvable:$true] %s549
      %552 = dma.vmem_to_hbm [thread:$0]  %s550, 32, %s10, [#allocation10]
    $region57: #{tpu_custom_call.1} parent=1 // pred_fallthru
      _
    // Predicated region
    $region58: #{tpu_custom_call.1} parent=1 // pred_check
      _
    $region59: #{tpu_custom_call.1} parent=1 // pred_check_branch
      %554 = sbr.rel (0) target = $region61
    $region60: #{tpu_custom_call.1} parent=1 // pred_region
      %555 = dma.done [#allocation4], 32
    $region61: #{tpu_custom_call.1} parent=1 // pred_fallthru
      _
    // Predicated region
    $region62: #{tpu_custom_call.1} parent=1 // pred_check
      _
    $region63: #{tpu_custom_call.1} parent=1 // pred_check_branch
      %557 = sbr.rel (0) target = $region65
    $region64: #{tpu_custom_call.1} parent=1 // pred_region
      %558 = dma.done [#allocation10], 32
    $region65: #{tpu_custom_call.1} parent=1 // pred_fallthru
      _
    // Predicated region
    $region66: #{tpu_custom_call.1} parent=1 // pred_check
      _
    $region67: #{tpu_custom_call.1} parent=1 // pred_check_branch
      %560 = sbr.rel (0) target = $region69
    $region68: #{tpu_custom_call.1} parent=1 // pred_region
      %561 = dma.done [#allocation10], 32
    $region69: #{tpu_custom_call.1} parent=1 // pred_fallthru
      _
    %562 = vsyncpa [#allocation3], 1
    %563 = vsyncpa [#allocation6], 1
    %564 = vsyncpa [#allocation4], 1
    %565 = vsyncpa [#allocation10], 1

</llo_original>
